<compile_context>
chip_gen: v6e
topology: v6e:2x2x1
jax: 0.10.0
libtpu: 0.0.40
codegen_flags: <defaults>
</compile_context>

<pallas_src>
import jax
import jax.numpy as jnp
from jax.experimental import pallas as pl
from jax.experimental.pallas import tpu as pltpu


def _center_loss_kernel(lab_ref, x_ref, c_ref, dist_ref):
    """Per batch tile: clamped squared distance of each sample to its own center."""
    x_nat = x_ref[...]                              # (TB, D) native dtype (MXU feed)
    c_nat = c_ref[...]                              # (C,  D) native dtype (resident)
    lab = lab_ref[...]                              # (TB, 1) int32 labels

    x32 = x_nat.astype(jnp.float32)
    c32 = c_nat.astype(jnp.float32)

    # ||x_i||^2 per row -> (TB, 1)   (VPU mul + XLU lane reduce)
    xsq = jnp.sum(x32 * x32, axis=1, keepdims=True)

    # ||c_j||^2 -> (C,)   centers are already resident in VMEM; recomputing this
    # per tile is ~0.4% of the tile's matmul work, cheaper than a separate XLA op.
    csq = jnp.sum(c32 * c32, axis=1)

    # Cross term on the MXU: contract the feature axis of both operands
    # (no explicit transpose / relayout of the centers), f32 accumulation.
    cross = jax.lax.dot_general(
        x_nat, c_nat, (((1,), (1,)), ((), ())),
        preferred_element_type=jnp.float32)         # (TB, C)

    # Squared Euclidean distance matrix, same formula as the PyTorch addmm_.
    dm = xsq - 2.0 * cross + csq                    # (TB, C)

    # Pick the own-class column with compare+select, reduce the single
    # surviving entry per row, clamp exactly like the module.
    col = jax.lax.broadcasted_iota(jnp.int32, dm.shape, 1)
    row_d = jnp.sum(jnp.where(col == lab, dm, 0.0), axis=1, keepdims=True)
    dist_ref[...] = jnp.clip(row_d, 1e-12, 1e12)


def center_loss(inputs, labels, centers, *, tile_b=128):
    """inputs: (B, D) features, labels: (B,) int class ids, centers: (C, D)."""
    b, d = inputs.shape
    c, d2 = centers.shape
    assert d == d2, "feature dim of inputs and centers must match"
    assert labels.shape[0] == b, "batch size of features and labels are not equal"

    # Batch tile: multiple of 8 sublanes; pad the batch to a whole number of tiles.
    b_pad8 = ((b + 7) // 8) * 8
    tile_b = min(tile_b, b_pad8)
    b_pad = ((b + tile_b - 1) // tile_b) * tile_b
    if b_pad != b:
        inputs = jnp.pad(inputs, ((0, b_pad - b), (0, 0)))
        labels = jnp.pad(labels, ((0, b_pad - b),))
    lab2 = labels.astype(jnp.int32).reshape(b_pad, 1)

    grid = (b_pad // tile_b,)
    dists = pl.pallas_call(
        _center_loss_kernel,
        out_shape=jax.ShapeDtypeStruct((b_pad, 1), jnp.float32),
        grid=grid,
        in_specs=[
            pl.BlockSpec((tile_b, 1), lambda i: (i, 0)),   # labels (per tile)
            pl.BlockSpec((tile_b, d), lambda i: (i, 0)),   # features (native dtype)
            pl.BlockSpec((c, d), lambda i: (0, 0)),        # centers (resident)
        ],
        out_specs=pl.BlockSpec((tile_b, 1), lambda i: (i, 0)),
        compiler_params=pltpu.CompilerParams(
            dimension_semantics=("parallel",)),
    )(lab2, inputs, centers)

    # Global mean over the TRUE batch size (padded rows are sliced away).
    return jnp.sum(dists[:b, 0]) / b


def _reference(inputs, labels, centers):
    """Pure-JAX reference mirroring the PyTorch module."""
    b = inputs.shape[0]
    x = inputs.astype(jnp.float32)
    cen = centers.astype(jnp.float32)
    dm = (jnp.sum(x * x, axis=1, keepdims=True)
          + jnp.sum(cen * cen, axis=1)[None, :]
          - 2.0 * jnp.matmul(x, cen.T))
    d = dm[jnp.arange(b), labels]
    return jnp.mean(jnp.clip(d, 1e-12, 1e12))


if __name__ == "__main__":
    key = jax.random.PRNGKey(0)
    k_x, k_c, k_t, k_x2, k_t2 = jax.random.split(key, 5)

    num_classes = 72   # module default
    feat_dim = 2048    # module default

    # Primary check: small batch, f32 (matches the module's shapes).
    batch = 8
    inputs = jax.random.normal(k_x, (batch, feat_dim), dtype=jnp.float32)
    centers = jax.random.normal(k_c, (num_classes, feat_dim), dtype=jnp.float32)
    labels = jax.random.randint(k_t, (batch,), 0, num_classes, dtype=jnp.int32)

    loss = jax.block_until_ready(center_loss(inputs, labels, centers))
    ref = _reference(inputs, labels, centers)
    assert jnp.allclose(loss, ref, rtol=2e-3, atol=1e-2), (loss, ref)

    # Padding path check: batch not a multiple of the sublane tile.
    batch2 = 13
    inputs2 = jax.random.normal(k_x2, (batch2, feat_dim), dtype=jnp.float32)
    labels2 = jax.random.randint(k_t2, (batch2,), 0, num_classes, dtype=jnp.int32)
    loss2 = jax.block_until_ready(center_loss(inputs2, labels2, centers))
    ref2 = _reference(inputs2, labels2, centers)
    assert jnp.allclose(loss2, ref2, rtol=2e-3, atol=1e-2), (loss2, ref2)

    print("KERNEL_OK")
</pallas_src>

<mosaic_0001>
module attributes {stable_mosaic.version = 11 : i64} {
  func.func @_center_loss_kernel(%arg0: i32, %arg1: memref<8x1xi32, #tpu.memory_space<vmem>>, %arg2: memref<8x2048xf32, #tpu.memory_space<vmem>>, %arg3: memref<72x2048xf32, #tpu.memory_space<vmem>>, %arg4: memref<8x1xf32, #tpu.memory_space<vmem>>) attributes {dimension_semantics = [#tpu.dimension_semantics<parallel>], iteration_bounds = array<i64: 1>, scalar_prefetch = 0 : i64, scratch_operands = 0 : i64, tpu.core_type = #tpu.core_type<tc>, window_params = [{transform_indices = @transform_0, window_bounds = array<i64: 8, 1>}, {transform_indices = @transform_1, window_bounds = array<i64: 8, 2048>}, {pipeline_mode = #tpu.pipeline_mode<synchronous>, transform_indices = @transform_2, window_bounds = array<i64: 72, 2048>}, {transform_indices = @transform_3, window_bounds = array<i64: 8, 1>}]} {
    %c0 = arith.constant 0 : index
    %c0_0 = arith.constant 0 : index
    %0 = vector.load %arg2[%c0, %c0_0] : memref<8x2048xf32, #tpu.memory_space<vmem>>, vector<8x2048xf32>
    %c0_1 = arith.constant 0 : index
    %c0_2 = arith.constant 0 : index
    %1 = vector.load %arg3[%c0_1, %c0_2] : memref<72x2048xf32, #tpu.memory_space<vmem>>, vector<72x2048xf32>
    %c0_3 = arith.constant 0 : index
    %c0_4 = arith.constant 0 : index
    %2 = vector.load %arg1[%c0_3, %c0_4] : memref<8x1xi32, #tpu.memory_space<vmem>>, vector<8x1xi32>
    %3 = arith.mulf %0, %0 : vector<8x2048xf32>
    %cst = arith.constant dense<0.000000e+00> : vector<8xf32>
    %4 = vector.multi_reduction <add>, %3, %cst [1] : vector<8x2048xf32> to vector<8xf32>
    %5 = vector.shape_cast %4 : vector<8xf32> to vector<8x1xf32>
    %6 = arith.mulf %1, %1 : vector<72x2048xf32>
    %cst_5 = arith.constant dense<0.000000e+00> : vector<72xf32>
    %7 = vector.multi_reduction <add>, %6, %cst_5 [1] : vector<72x2048xf32> to vector<72xf32>
    %cst_6 = arith.constant dense<0.000000e+00> : vector<8x72xf32>
    %8 = tpu.matmul %0, %1, %cst_6 {dimension_numbers = #tpu.dot_dimension_numbers<[1], [1], [0], [0], [0, 0, 1, 0], [], []>} : vector<8x2048xf32>, vector<72x2048xf32>, vector<8x72xf32> -> vector<8x72xf32>
    %cst_7 = arith.constant 2.000000e+00 : f32
    %9 = vector.broadcast %cst_7 : f32 to vector<8x72xf32>
    %10 = arith.mulf %9, %8 : vector<8x72xf32>
    %11 = vector.broadcast %5 : vector<8x1xf32> to vector<8x72xf32>
    %12 = arith.subf %11, %10 : vector<8x72xf32>
    %13 = vector.shape_cast %7 : vector<72xf32> to vector<1x72xf32>
    %14 = vector.broadcast %13 : vector<1x72xf32> to vector<8x72xf32>
    %15 = arith.addf %12, %14 : vector<8x72xf32>
    %16 = tpu.iota {dimensions = array<i32: 1>} : vector<8x72xi32>
    %17 = vector.broadcast %2 : vector<8x1xi32> to vector<8x72xi32>
    %18 = arith.cmpi eq, %16, %17 : vector<8x72xi32>
    %cst_8 = arith.constant 0.000000e+00 : f32
    %19 = vector.broadcast %cst_8 : f32 to vector<8x72xf32>
    %20 = arith.select %18, %15, %19 : vector<8x72xi1>, vector<8x72xf32>
    %cst_9 = arith.constant dense<0.000000e+00> : vector<8xf32>
    %21 = vector.multi_reduction <add>, %20, %cst_9 [1] : vector<8x72xf32> to vector<8xf32>
    %22 = vector.shape_cast %21 : vector<8xf32> to vector<8x1xf32>
    %cst_10 = arith.constant 9.99999996E-13 : f32
    %cst_11 = arith.constant 9.99999995E+11 : f32
    %23 = vector.broadcast %cst_10 : f32 to vector<8x1xf32>
    %24 = arith.maximumf %23, %22 : vector<8x1xf32>
    %25 = vector.broadcast %cst_11 : f32 to vector<8x1xf32>
    %26 = arith.minimumf %25, %24 : vector<8x1xf32>
    %c0_12 = arith.constant 0 : index
    %c0_13 = arith.constant 0 : index
    %27 = vector.load %arg4[%c0_12, %c0_13] : memref<8x1xf32, #tpu.memory_space<vmem>>, vector<8x1xf32>
    tpu.vector_store %arg4[%c0_12, %c0_13], %26 {strides = array<i32>} : memref<8x1xf32, #tpu.memory_space<vmem>>, vector<8x1xf32>,
    return
  }
  func.func @transform_0(%arg0: i32) -> (i32, i32) {
    %c0_i32 = arith.constant 0 : i32
    %c0_i32_0 = arith.constant 0 : i32
    return %arg0, %c0_i32 : i32, i32
  }
  func.func @transform_1(%arg0: i32) -> (i32, i32) {
    %c0_i32 = arith.constant 0 : i32
    %c0_i32_0 = arith.constant 0 : i32
    return %arg0, %c0_i32 : i32, i32
  }
  func.func @transform_2(%arg0: i32) -> (i32, i32) {
    %c0_i32 = arith.constant 0 : i32
    %c0_i32_0 = arith.constant 0 : i32
    %c0_i32_1 = arith.constant 0 : i32
    return %c0_i32, %c0_i32_0 : i32, i32
  }
  func.func @transform_3(%arg0: i32) -> (i32, i32) {
    %c0_i32 = arith.constant 0 : i32
    %c0_i32_0 = arith.constant 0 : i32
    return %arg0, %c0_i32 : i32, i32
  }
}

</mosaic_0001>

<llo_original>
// kernel: tpu_custom_call.1
$region0: #{tpu_custom_call.1}
  #allocation0 [shape = 'u32[]', space=smem, size = 0x4, offset = 0x4, fixed_abs, tag = 'smem constant byte address 0x4 - core index']
  #allocation1 [shape = 'u32[144,128]{1,0:T(1,128)}', space=vmem, size = 0x12000, scoped, tag = 'internal scratch']
  %s0 = inlined_call_operand.vmem [shape: s32[8,1], index: 0, kind: input, shape index: {}]
  %s1 = inlined_call_operand.hbm [shape: f32[8,2048], index: 1, kind: input, shape index: {}]
  %s2 = inlined_call_operand.hbm [shape: f32[72,2048], index: 2, kind: input, shape index: {}]
  %s3 = inlined_call_operand.vmem [shape: f32[8,1], index: 3, kind: output, shape index: {}]
  %s4 = sld [smem:[#allocation0]]
  $region30: #{tpu_custom_call.1} parent=0
    _
  %s6 = ssub.s32 1, %s4
  %s7 = scalar_select 0, %s6, %s4
  $region1: #{tpu_custom_call.1} parent=0
    #allocation2 [shape = 'u8[65536]{0}', space=vmem, size = 0x10000, scoped, tag = 'input window, operand 1, single buffered']
    #allocation3 [shape = 's32[1]{0}', space=sflag, size = 0x4, scoped, tag = 'scoped memory for tpu_custom_call.1']
    #allocation4 [shape = 'u8[589824]{0}', space=vmem, size = 0x90000, scoped, tag = 'input window, operand 2, single buffered']
    #allocation5 [shape = 's32[1]{0}', space=sflag, size = 0x4, scoped, tag = 'scoped memory for tpu_custom_call.1']
    %8 = vsyncpa [#allocation3], 0
    %9 = vsyncpa [#allocation5], 0
    // Predicated region
    $region2: #{tpu_custom_call.1} parent=1 // pred_check
      _
    $region3: #{tpu_custom_call.1} parent=1 // pred_check_branch
      %11 = sbr.rel (0) target = $region5
    $region4: #{tpu_custom_call.1} parent=1 // pred_region
      _
    $region5: #{tpu_custom_call.1} parent=1 // pred_fallthru
      _
    // Predicated region
    $region6: #{tpu_custom_call.1} parent=1 // pred_check
      _
    $region7: #{tpu_custom_call.1} parent=1 // pred_check_branch
      %13 = sbr.rel (0) target = $region9
    $region8: #{tpu_custom_call.1} parent=1 // pred_region
      %s15 = ssub.s32 2048, 2048
      %16 = vsyncadd [#allocation3], %s15
      %s18 = sshll.u32 [#allocation2], 4
      %s19 = int_to_ptr.vmem [resolvable:$true] %s18
      %21 = dma.hbm_to_vmem [thread:$0]  %s1, 2048, %s19, [#allocation3]
    $region9: #{tpu_custom_call.1} parent=1 // pred_fallthru
      _
    // Predicated region
    $region10: #{tpu_custom_call.1} parent=1 // pred_check
      _
    $region11: #{tpu_custom_call.1} parent=1 // pred_check_branch
      %23 = sbr.rel (0) target = $region13
    $region12: #{tpu_custom_call.1} parent=1 // pred_region
      %s25 = ssub.s32 18432, 18432
      %26 = vsyncadd [#allocation5], %s25
      %s27 = sshll.u32 [#allocation4], 4
      %s28 = int_to_ptr.vmem [resolvable:$true] %s27
      %33 = dma.hbm_to_vmem [thread:$0]  %s2, 18432, %s28, [#allocation5], 2048, 2048, 128
    $region13: #{tpu_custom_call.1} parent=1 // pred_fallthru
      _
    // Predicated region
    $region14: #{tpu_custom_call.1} parent=1 // pred_check
      _
    $region15: #{tpu_custom_call.1} parent=1 // pred_check_branch
      %35 = sbr.rel (0) target = $region17
    $region16: #{tpu_custom_call.1} parent=1 // pred_region
      %36 = dma.done [#allocation3], 2048
    $region17: #{tpu_custom_call.1} parent=1 // pred_fallthru
      _
    // Predicated region
    $region18: #{tpu_custom_call.1} parent=1 // pred_check
      _
    $region19: #{tpu_custom_call.1} parent=1 // pred_check_branch
      %38 = sbr.rel (0) target = $region21
    $region20: #{tpu_custom_call.1} parent=1 // pred_region
      %39 = dma.done [#allocation5], 18432
    $region21: #{tpu_custom_call.1} parent=1 // pred_fallthru
      _
    %v40 = vld [vmem:[#allocation2] sm:$0xff]
    %v41 = vld [vmem:[#allocation2 + $0x8] sm:$0xff]
    %v42 = vld [vmem:[#allocation2 + $0x10] sm:$0xff]
    %v43 = vld [vmem:[#allocation2 + $0x18] sm:$0xff]
    %v44 = vld [vmem:[#allocation2 + $0x20] sm:$0xff]
    %v45 = vld [vmem:[#allocation2 + $0x28] sm:$0xff]
    %v46 = vld [vmem:[#allocation2 + $0x30] sm:$0xff]
    %v47 = vld [vmem:[#allocation2 + $0x38] sm:$0xff]
    %v48 = vld [vmem:[#allocation2 + $0x40] sm:$0xff]
    %v49 = vld [vmem:[#allocation2 + $0x48] sm:$0xff]
    %v50 = vld [vmem:[#allocation2 + $0x50] sm:$0xff]
    %v51 = vld [vmem:[#allocation2 + $0x58] sm:$0xff]
    %v52 = vld [vmem:[#allocation2 + $0x60] sm:$0xff]
    %v53 = vld [vmem:[#allocation2 + $0x68] sm:$0xff]
    %v54 = vld [vmem:[#allocation2 + $0x70] sm:$0xff]
    %v55 = vld [vmem:[#allocation2 + $0x78] sm:$0xff]
    %v56 = vld [vmem:[#allocation4] sm:$0xff]
    %v57 = vld [vmem:[#allocation4 + $0x8] sm:$0xff]
    %v58 = vld [vmem:[#allocation4 + $0x10] sm:$0xff]
    %v59 = vld [vmem:[#allocation4 + $0x18] sm:$0xff]
    %v60 = vld [vmem:[#allocation4 + $0x20] sm:$0xff]
    %v61 = vld [vmem:[#allocation4 + $0x28] sm:$0xff]
    %v62 = vld [vmem:[#allocation4 + $0x30] sm:$0xff]
    %v63 = vld [vmem:[#allocation4 + $0x38] sm:$0xff]
    %v64 = vld [vmem:[#allocation4 + $0x40] sm:$0xff]
    %v65 = vld [vmem:[#allocation4 + $0x48] sm:$0xff]
    %v66 = vld [vmem:[#allocation4 + $0x50] sm:$0xff]
    %v67 = vld [vmem:[#allocation4 + $0x58] sm:$0xff]
    %v68 = vld [vmem:[#allocation4 + $0x60] sm:$0xff]
    %v69 = vld [vmem:[#allocation4 + $0x68] sm:$0xff]
    %v70 = vld [vmem:[#allocation4 + $0x70] sm:$0xff]
    %v71 = vld [vmem:[#allocation4 + $0x78] sm:$0xff]
    %v72 = vld [vmem:[#allocation4 + $0x80] sm:$0xff]
    %v73 = vld [vmem:[#allocation4 + $0x88] sm:$0xff]
    %v74 = vld [vmem:[#allocation4 + $0x90] sm:$0xff]
    %v75 = vld [vmem:[#allocation4 + $0x98] sm:$0xff]
    %v76 = vld [vmem:[#allocation4 + $0xa0] sm:$0xff]
    %v77 = vld [vmem:[#allocation4 + $0xa8] sm:$0xff]
    %v78 = vld [vmem:[#allocation4 + $0xb0] sm:$0xff]
    %v79 = vld [vmem:[#allocation4 + $0xb8] sm:$0xff]
    %v80 = vld [vmem:[#allocation4 + $0xc0] sm:$0xff]
    %v81 = vld [vmem:[#allocation4 + $0xc8] sm:$0xff]
    %v82 = vld [vmem:[#allocation4 + $0xd0] sm:$0xff]
    %v83 = vld [vmem:[#allocation4 + $0xd8] sm:$0xff]
    %v84 = vld [vmem:[#allocation4 + $0xe0] sm:$0xff]
    %v85 = vld [vmem:[#allocation4 + $0xe8] sm:$0xff]
    %v86 = vld [vmem:[#allocation4 + $0xf0] sm:$0xff]
    %v87 = vld [vmem:[#allocation4 + $0xf8] sm:$0xff]
    %v88 = vld [vmem:[#allocation4 + $0x100] sm:$0xff]
    %v89 = vld [vmem:[#allocation4 + $0x108] sm:$0xff]
    %v90 = vld [vmem:[#allocation4 + $0x110] sm:$0xff]
    %v91 = vld [vmem:[#allocation4 + $0x118] sm:$0xff]
    %v92 = vld [vmem:[#allocation4 + $0x120] sm:$0xff]
    %v93 = vld [vmem:[#allocation4 + $0x128] sm:$0xff]
    %v94 = vld [vmem:[#allocation4 + $0x130] sm:$0xff]
    %v95 = vld [vmem:[#allocation4 + $0x138] sm:$0xff]
    %v96 = vld [vmem:[#allocation4 + $0x140] sm:$0xff]
    %v97 = vld [vmem:[#allocation4 + $0x148] sm:$0xff]
    %v98 = vld [vmem:[#allocation4 + $0x150] sm:$0xff]
    %v99 = vld [vmem:[#allocation4 + $0x158] sm:$0xff]
    %v100 = vld [vmem:[#allocation4 + $0x160] sm:$0xff]
    %v101 = vld [vmem:[#allocation4 + $0x168] sm:$0xff]
    %v102 = vld [vmem:[#allocation4 + $0x170] sm:$0xff]
    %v103 = vld [vmem:[#allocation4 + $0x178] sm:$0xff]
    %v104 = vld [vmem:[#allocation4 + $0x180] sm:$0xff]
    %v105 = vld [vmem:[#allocation4 + $0x188] sm:$0xff]
    %v106 = vld [vmem:[#allocation4 + $0x190] sm:$0xff]
    %v107 = vld [vmem:[#allocation4 + $0x198] sm:$0xff]
    %v108 = vld [vmem:[#allocation4 + $0x1a0] sm:$0xff]
    %v109 = vld [vmem:[#allocation4 + $0x1a8] sm:$0xff]
    %v110 = vld [vmem:[#allocation4 + $0x1b0] sm:$0xff]
    %v111 = vld [vmem:[#allocation4 + $0x1b8] sm:$0xff]
    %v112 = vld [vmem:[#allocation4 + $0x1c0] sm:$0xff]
    %v113 = vld [vmem:[#allocation4 + $0x1c8] sm:$0xff]
    %v114 = vld [vmem:[#allocation4 + $0x1d0] sm:$0xff]
    %v115 = vld [vmem:[#allocation4 + $0x1d8] sm:$0xff]
    %v116 = vld [vmem:[#allocation4 + $0x1e0] sm:$0xff]
    %v117 = vld [vmem:[#allocation4 + $0x1e8] sm:$0xff]
    %v118 = vld [vmem:[#allocation4 + $0x1f0] sm:$0xff]
    %v119 = vld [vmem:[#allocation4 + $0x1f8] sm:$0xff]
    %v120 = vld [vmem:[#allocation4 + $0x200] sm:$0xff]
    %v121 = vld [vmem:[#allocation4 + $0x208] sm:$0xff]
    %v122 = vld [vmem:[#allocation4 + $0x210] sm:$0xff]
    %v123 = vld [vmem:[#allocation4 + $0x218] sm:$0xff]
    %v124 = vld [vmem:[#allocation4 + $0x220] sm:$0xff]
    %v125 = vld [vmem:[#allocation4 + $0x228] sm:$0xff]
    %v126 = vld [vmem:[#allocation4 + $0x230] sm:$0xff]
    %v127 = vld [vmem:[#allocation4 + $0x238] sm:$0xff]
    %v128 = vld [vmem:[#allocation4 + $0x240] sm:$0xff]
    %v129 = vld [vmem:[#allocation4 + $0x248] sm:$0xff]
    %v130 = vld [vmem:[#allocation4 + $0x250] sm:$0xff]
    %v131 = vld [vmem:[#allocation4 + $0x258] sm:$0xff]
    %v132 = vld [vmem:[#allocation4 + $0x260] sm:$0xff]
    %v133 = vld [vmem:[#allocation4 + $0x268] sm:$0xff]
    %v134 = vld [vmem:[#allocation4 + $0x270] sm:$0xff]
    %v135 = vld [vmem:[#allocation4 + $0x278] sm:$0xff]
    %v136 = vld [vmem:[#allocation4 + $0x280] sm:$0xff]
    %v137 = vld [vmem:[#allocation4 + $0x288] sm:$0xff]
    %v138 = vld [vmem:[#allocation4 + $0x290] sm:$0xff]
    %v139 = vld [vmem:[#allocation4 + $0x298] sm:$0xff]
    %v140 = vld [vmem:[#allocation4 + $0x2a0] sm:$0xff]
    %v141 = vld [vmem:[#allocation4 + $0x2a8] sm:$0xff]
    %v142 = vld [vmem:[#allocation4 + $0x2b0] sm:$0xff]
    %v143 = vld [vmem:[#allocation4 + $0x2b8] sm:$0xff]
    %v144 = vld [vmem:[#allocation4 + $0x2c0] sm:$0xff]
    %v145 = vld [vmem:[#allocation4 + $0x2c8] sm:$0xff]
    %v146 = vld [vmem:[#allocation4 + $0x2d0] sm:$0xff]
    %v147 = vld [vmem:[#allocation4 + $0x2d8] sm:$0xff]
    %v148 = vld [vmem:[#allocation4 + $0x2e0] sm:$0xff]
    %v149 = vld [vmem:[#allocation4 + $0x2e8] sm:$0xff]
    %v150 = vld [vmem:[#allocation4 + $0x2f0] sm:$0xff]
    %v151 = vld [vmem:[#allocation4 + $0x2f8] sm:$0xff]
    %v152 = vld [vmem:[#allocation4 + $0x300] sm:$0xff]
    %v153 = vld [vmem:[#allocation4 + $0x308] sm:$0xff]
    %v154 = vld [vmem:[#allocation4 + $0x310] sm:$0xff]
    %v155 = vld [vmem:[#allocation4 + $0x318] sm:$0xff]
    %v156 = vld [vmem:[#allocation4 + $0x320] sm:$0xff]
    %v157 = vld [vmem:[#allocation4 + $0x328] sm:$0xff]
    %v158 = vld [vmem:[#allocation4 + $0x330] sm:$0xff]
    %v159 = vld [vmem:[#allocation4 + $0x338] sm:$0xff]
    %v160 = vld [vmem:[#allocation4 + $0x340] sm:$0xff]
    %v161 = vld [vmem:[#allocation4 + $0x348] sm:$0xff]
    %v162 = vld [vmem:[#allocation4 + $0x350] sm:$0xff]
    %v163 = vld [vmem:[#allocation4 + $0x358] sm:$0xff]
    %v164 = vld [vmem:[#allocation4 + $0x360] sm:$0xff]
    %v165 = vld [vmem:[#allocation4 + $0x368] sm:$0xff]
    %v166 = vld [vmem:[#allocation4 + $0x370] sm:$0xff]
    %v167 = vld [vmem:[#allocation4 + $0x378] sm:$0xff]
    %v168 = vld [vmem:[#allocation4 + $0x380] sm:$0xff]
    %v169 = vld [vmem:[#allocation4 + $0x388] sm:$0xff]
    %v170 = vld [vmem:[#allocation4 + $0x390] sm:$0xff]
    %v171 = vld [vmem:[#allocation4 + $0x398] sm:$0xff]
    %v172 = vld [vmem:[#allocation4 + $0x3a0] sm:$0xff]
    %v173 = vld [vmem:[#allocation4 + $0x3a8] sm:$0xff]
    %v174 = vld [vmem:[#allocation4 + $0x3b0] sm:$0xff]
    %v175 = vld [vmem:[#allocation4 + $0x3b8] sm:$0xff]
    %v176 = vld [vmem:[#allocation4 + $0x3c0] sm:$0xff]
    %v177 = vld [vmem:[#allocation4 + $0x3c8] sm:$0xff]
    %v178 = vld [vmem:[#allocation4 + $0x3d0] sm:$0xff]
    %v179 = vld [vmem:[#allocation4 + $0x3d8] sm:$0xff]
    %v180 = vld [vmem:[#allocation4 + $0x3e0] sm:$0xff]
    %v181 = vld [vmem:[#allocation4 + $0x3e8] sm:$0xff]
    %v182 = vld [vmem:[#allocation4 + $0x3f0] sm:$0xff]
    %v183 = vld [vmem:[#allocation4 + $0x3f8] sm:$0xff]
    %v184 = vld [vmem:[#allocation4 + $0x400] sm:$0xff]
    %v185 = vld [vmem:[#allocation4 + $0x408] sm:$0xff]
    %v186 = vld [vmem:[#allocation4 + $0x410] sm:$0xff]
    %v187 = vld [vmem:[#allocation4 + $0x418] sm:$0xff]
    %v188 = vld [vmem:[#allocation4 + $0x420] sm:$0xff]
    %v189 = vld [vmem:[#allocation4 + $0x428] sm:$0xff]
    %v190 = vld [vmem:[#allocation4 + $0x430] sm:$0xff]
    %v191 = vld [vmem:[#allocation4 + $0x438] sm:$0xff]
    %v192 = vld [vmem:[#allocation4 + $0x440] sm:$0xff]
    %v193 = vld [vmem:[#allocation4 + $0x448] sm:$0xff]
    %v194 = vld [vmem:[#allocation4 + $0x450] sm:$0xff]
    %v195 = vld [vmem:[#allocation4 + $0x458] sm:$0xff]
    %v196 = vld [vmem:[#allocation4 + $0x460] sm:$0xff]
    %v197 = vld [vmem:[#allocation4 + $0x468] sm:$0xff]
    %v198 = vld [vmem:[#allocation4 + $0x470] sm:$0xff]
    %v199 = vld [vmem:[#allocation4 + $0x478] sm:$0xff]
    %v200 = vld [vmem:[%s0] sm:$0xff]
    %v201 = vmul.f32 %v40, %v40
    %v202 = vmul.f32 %v41, %v41
    %v203 = vmul.f32 %v42, %v42
    %v204 = vmul.f32 %v43, %v43
    %v205 = vmul.f32 %v44, %v44
    %v206 = vmul.f32 %v45, %v45
    %v207 = vmul.f32 %v46, %v46
    %v208 = vmul.f32 %v47, %v47
    %v209 = vmul.f32 %v48, %v48
    %v210 = vmul.f32 %v49, %v49
    %v211 = vmul.f32 %v50, %v50
    %v212 = vmul.f32 %v51, %v51
    %v213 = vmul.f32 %v52, %v52
    %v214 = vmul.f32 %v53, %v53
    %v215 = vmul.f32 %v54, %v54
    %v216 = vmul.f32 %v55, %v55
    %v217 = vadd.f32 %v201, %v202
    %v218 = vadd.f32 %v217, %v203
    %v219 = vadd.f32 %v218, %v204
    %v220 = vadd.f32 %v219, %v205
    %v221 = vadd.f32 %v220, %v206
    %v222 = vadd.f32 %v221, %v207
    %v223 = vadd.f32 %v222, %v208
    %v224 = vadd.f32 %v223, %v209
    %v225 = vadd.f32 %v224, %v210
    %v226 = vadd.f32 %v225, %v211
    %v227 = vadd.f32 %v226, %v212
    %v228 = vadd.f32 %v227, %v213
    %v229 = vadd.f32 %v228, %v214
    %v230 = vadd.f32 %v229, %v215
    %v231 = vadd.f32 %v230, %v216
    %232 = vadd.xlane.f32.xlu0 %v231
    %v233 = vpop.xlane.xlu0 %232
    %v234 = vmul.f32 %v56, %v56
    %v235 = vmul.f32 %v57, %v57
    %v236 = vmul.f32 %v58, %v58
    %v237 = vmul.f32 %v59, %v59
    %v238 = vmul.f32 %v60, %v60
    %v239 = vmul.f32 %v61, %v61
    %v240 = vmul.f32 %v62, %v62
    %v241 = vmul.f32 %v63, %v63
    %v242 = vmul.f32 %v64, %v64
    %v243 = vmul.f32 %v65, %v65
    %v244 = vmul.f32 %v66, %v66
    %v245 = vmul.f32 %v67, %v67
    %v246 = vmul.f32 %v68, %v68
    %v247 = vmul.f32 %v69, %v69
    %v248 = vmul.f32 %v70, %v70
    %v249 = vmul.f32 %v71, %v71
    %v250 = vmul.f32 %v72, %v72
    %v251 = vmul.f32 %v73, %v73
    %v252 = vmul.f32 %v74, %v74
    %v253 = vmul.f32 %v75, %v75
    %v254 = vmul.f32 %v76, %v76
    %v255 = vmul.f32 %v77, %v77
    %v256 = vmul.f32 %v78, %v78
    %v257 = vmul.f32 %v79, %v79
    %v258 = vmul.f32 %v80, %v80
    %v259 = vmul.f32 %v81, %v81
    %v260 = vmul.f32 %v82, %v82
    %v261 = vmul.f32 %v83, %v83
    %v262 = vmul.f32 %v84, %v84
    %v263 = vmul.f32 %v85, %v85
    %v264 = vmul.f32 %v86, %v86
    %v265 = vmul.f32 %v87, %v87
    %v266 = vmul.f32 %v88, %v88
    %v267 = vmul.f32 %v89, %v89
    %v268 = vmul.f32 %v90, %v90
    %v269 = vmul.f32 %v91, %v91
    %v270 = vmul.f32 %v92, %v92
    %v271 = vmul.f32 %v93, %v93
    %v272 = vmul.f32 %v94, %v94
    %v273 = vmul.f32 %v95, %v95
    %v274 = vmul.f32 %v96, %v96
    %v275 = vmul.f32 %v97, %v97
    %v276 = vmul.f32 %v98, %v98
    %v277 = vmul.f32 %v99, %v99
    %v278 = vmul.f32 %v100, %v100
    %v279 = vmul.f32 %v101, %v101
    %v280 = vmul.f32 %v102, %v102
    %v281 = vmul.f32 %v103, %v103
    %v282 = vmul.f32 %v104, %v104
    %v283 = vmul.f32 %v105, %v105
    %v284 = vmul.f32 %v106, %v106
    %v285 = vmul.f32 %v107, %v107
    %v286 = vmul.f32 %v108, %v108
    %v287 = vmul.f32 %v109, %v109
    %v288 = vmul.f32 %v110, %v110
    %v289 = vmul.f32 %v111, %v111
    %v290 = vmul.f32 %v112, %v112
    %v291 = vmul.f32 %v113, %v113
    %v292 = vmul.f32 %v114, %v114
    %v293 = vmul.f32 %v115, %v115
    %v294 = vmul.f32 %v116, %v116
    %v295 = vmul.f32 %v117, %v117
    %v296 = vmul.f32 %v118, %v118
    %v297 = vmul.f32 %v119, %v119
    %v298 = vmul.f32 %v120, %v120
    %v299 = vmul.f32 %v121, %v121
    %v300 = vmul.f32 %v122, %v122
    %v301 = vmul.f32 %v123, %v123
    %v302 = vmul.f32 %v124, %v124
    %v303 = vmul.f32 %v125, %v125
    %v304 = vmul.f32 %v126, %v126
    %v305 = vmul.f32 %v127, %v127
    %v306 = vmul.f32 %v128, %v128
    %v307 = vmul.f32 %v129, %v129
    %v308 = vmul.f32 %v130, %v130
    %v309 = vmul.f32 %v131, %v131
    %v310 = vmul.f32 %v132, %v132
    %v311 = vmul.f32 %v133, %v133
    %v312 = vmul.f32 %v134, %v134
    %v313 = vmul.f32 %v135, %v135
    %v314 = vmul.f32 %v136, %v136
    %v315 = vmul.f32 %v137, %v137
    %v316 = vmul.f32 %v138, %v138
    %v317 = vmul.f32 %v139, %v139
    %v318 = vmul.f32 %v140, %v140
    %v319 = vmul.f32 %v141, %v141
    %v320 = vmul.f32 %v142, %v142
    %v321 = vmul.f32 %v143, %v143
    %v322 = vmul.f32 %v144, %v144
    %v323 = vmul.f32 %v145, %v145
    %v324 = vmul.f32 %v146, %v146
    %v325 = vmul.f32 %v147, %v147
    %v326 = vmul.f32 %v148, %v148
    %v327 = vmul.f32 %v149, %v149
    %v328 = vmul.f32 %v150, %v150
    %v329 = vmul.f32 %v151, %v151
    %v330 = vmul.f32 %v152, %v152
    %v331 = vmul.f32 %v153, %v153
    %v332 = vmul.f32 %v154, %v154
    %v333 = vmul.f32 %v155, %v155
    %v334 = vmul.f32 %v156, %v156
    %v335 = vmul.f32 %v157, %v157
    %v336 = vmul.f32 %v158, %v158
    %v337 = vmul.f32 %v159, %v159
    %v338 = vmul.f32 %v160, %v160
    %v339 = vmul.f32 %v161, %v161
    %v340 = vmul.f32 %v162, %v162
    %v341 = vmul.f32 %v163, %v163
    %v342 = vmul.f32 %v164, %v164
    %v343 = vmul.f32 %v165, %v165
    %v344 = vmul.f32 %v166, %v166
    %v345 = vmul.f32 %v167, %v167
    %v346 = vmul.f32 %v168, %v168
    %v347 = vmul.f32 %v169, %v169
    %v348 = vmul.f32 %v170, %v170
    %v349 = vmul.f32 %v171, %v171
    %v350 = vmul.f32 %v172, %v172
    %v351 = vmul.f32 %v173, %v173
    %v352 = vmul.f32 %v174, %v174
    %v353 = vmul.f32 %v175, %v175
    %v354 = vmul.f32 %v176, %v176
    %v355 = vmul.f32 %v177, %v177
    %v356 = vmul.f32 %v178, %v178
    %v357 = vmul.f32 %v179, %v179
    %v358 = vmul.f32 %v180, %v180
    %v359 = vmul.f32 %v181, %v181
    %v360 = vmul.f32 %v182, %v182
    %v361 = vmul.f32 %v183, %v183
    %v362 = vmul.f32 %v184, %v184
    %v363 = vmul.f32 %v185, %v185
    %v364 = vmul.f32 %v186, %v186
    %v365 = vmul.f32 %v187, %v187
    %v366 = vmul.f32 %v188, %v188
    %v367 = vmul.f32 %v189, %v189
    %v368 = vmul.f32 %v190, %v190
    %v369 = vmul.f32 %v191, %v191
    %v370 = vmul.f32 %v192, %v192
    %v371 = vmul.f32 %v193, %v193
    %v372 = vmul.f32 %v194, %v194
    %v373 = vmul.f32 %v195, %v195
    %v374 = vmul.f32 %v196, %v196
    %v375 = vmul.f32 %v197, %v197
    %v376 = vmul.f32 %v198, %v198
    %v377 = vmul.f32 %v199, %v199
    %v378 = vadd.f32 %v234, %v235
    %v379 = vadd.f32 %v378, %v236
    %v380 = vadd.f32 %v379, %v237
    %v381 = vadd.f32 %v380, %v238
    %v382 = vadd.f32 %v381, %v239
    %v383 = vadd.f32 %v382, %v240
    %v384 = vadd.f32 %v383, %v241
    %v385 = vadd.f32 %v384, %v242
    %v386 = vadd.f32 %v385, %v243
    %v387 = vadd.f32 %v386, %v244
    %v388 = vadd.f32 %v387, %v245
    %v389 = vadd.f32 %v388, %v246
    %v390 = vadd.f32 %v389, %v247
    %v391 = vadd.f32 %v390, %v248
    %v392 = vadd.f32 %v391, %v249
    %393 = vadd.xlane.f32.xlu0 %v392
    %v394 = vpop.xlane.xlu0 %393
    %v395 = vadd.f32 %v250, %v251
    %v396 = vadd.f32 %v395, %v252
    %v397 = vadd.f32 %v396, %v253
    %v398 = vadd.f32 %v397, %v254
    %v399 = vadd.f32 %v398, %v255
    %v400 = vadd.f32 %v399, %v256
    %v401 = vadd.f32 %v400, %v257
    %v402 = vadd.f32 %v401, %v258
    %v403 = vadd.f32 %v402, %v259
    %v404 = vadd.f32 %v403, %v260
    %v405 = vadd.f32 %v404, %v261
    %v406 = vadd.f32 %v405, %v262
    %v407 = vadd.f32 %v406, %v263
    %v408 = vadd.f32 %v407, %v264
    %v409 = vadd.f32 %v408, %v265
    %410 = vadd.xlane.f32.xlu0 %v409
    %v411 = vpop.xlane.xlu0 %410
    %v412 = vadd.f32 %v266, %v267
    %v413 = vadd.f32 %v412, %v268
    %v414 = vadd.f32 %v413, %v269
    %v415 = vadd.f32 %v414, %v270
    %v416 = vadd.f32 %v415, %v271
    %v417 = vadd.f32 %v416, %v272
    %v418 = vadd.f32 %v417, %v273
    %v419 = vadd.f32 %v418, %v274
    %v420 = vadd.f32 %v419, %v275
    %v421 = vadd.f32 %v420, %v276
    %v422 = vadd.f32 %v421, %v277
    %v423 = vadd.f32 %v422, %v278
    %v424 = vadd.f32 %v423, %v279
    %v425 = vadd.f32 %v424, %v280
    %v426 = vadd.f32 %v425, %v281
    %427 = vadd.xlane.f32.xlu0 %v426
    %v428 = vpop.xlane.xlu0 %427
    %v429 = vadd.f32 %v282, %v283
    %v430 = vadd.f32 %v429, %v284
    %v431 = vadd.f32 %v430, %v285
    %v432 = vadd.f32 %v431, %v286
    %v433 = vadd.f32 %v432, %v287
    %v434 = vadd.f32 %v433, %v288
    %v435 = vadd.f32 %v434, %v289
    %v436 = vadd.f32 %v435, %v290
    %v437 = vadd.f32 %v436, %v291
    %v438 = vadd.f32 %v437, %v292
    %v439 = vadd.f32 %v438, %v293
    %v440 = vadd.f32 %v439, %v294
    %v441 = vadd.f32 %v440, %v295
    %v442 = vadd.f32 %v441, %v296
    %v443 = vadd.f32 %v442, %v297
    %444 = vadd.xlane.f32.xlu0 %v443
    %v445 = vpop.xlane.xlu0 %444
    %v446 = vadd.f32 %v298, %v299
    %v447 = vadd.f32 %v446, %v300
    %v448 = vadd.f32 %v447, %v301
    %v449 = vadd.f32 %v448, %v302
    %v450 = vadd.f32 %v449, %v303
    %v451 = vadd.f32 %v450, %v304
    %v452 = vadd.f32 %v451, %v305
    %v453 = vadd.f32 %v452, %v306
    %v454 = vadd.f32 %v453, %v307
    %v455 = vadd.f32 %v454, %v308
    %v456 = vadd.f32 %v455, %v309
    %v457 = vadd.f32 %v456, %v310
    %v458 = vadd.f32 %v457, %v311
    %v459 = vadd.f32 %v458, %v312
    %v460 = vadd.f32 %v459, %v313
    %461 = vadd.xlane.f32.xlu0 %v460
    %v462 = vpop.xlane.xlu0 %461
    %v463 = vadd.f32 %v314, %v315
    %v464 = vadd.f32 %v463, %v316
    %v465 = vadd.f32 %v464, %v317
    %v466 = vadd.f32 %v465, %v318
    %v467 = vadd.f32 %v466, %v319
    %v468 = vadd.f32 %v467, %v320
    %v469 = vadd.f32 %v468, %v321
    %v470 = vadd.f32 %v469, %v322
    %v471 = vadd.f32 %v470, %v323
    %v472 = vadd.f32 %v471, %v324
    %v473 = vadd.f32 %v472, %v325
    %v474 = vadd.f32 %v473, %v326
    %v475 = vadd.f32 %v474, %v327
    %v476 = vadd.f32 %v475, %v328
    %v477 = vadd.f32 %v476, %v329
    %478 = vadd.xlane.f32.xlu0 %v477
    %v479 = vpop.xlane.xlu0 %478
    %v480 = vadd.f32 %v330, %v331
    %v481 = vadd.f32 %v480, %v332
    %v482 = vadd.f32 %v481, %v333
    %v483 = vadd.f32 %v482, %v334
    %v484 = vadd.f32 %v483, %v335
    %v485 = vadd.f32 %v484, %v336
    %v486 = vadd.f32 %v485, %v337
    %v487 = vadd.f32 %v486, %v338
    %v488 = vadd.f32 %v487, %v339
    %v489 = vadd.f32 %v488, %v340
    %v490 = vadd.f32 %v489, %v341
    %v491 = vadd.f32 %v490, %v342
    %v492 = vadd.f32 %v491, %v343
    %v493 = vadd.f32 %v492, %v344
    %v494 = vadd.f32 %v493, %v345
    %495 = vadd.xlane.f32.xlu0 %v494
    %v496 = vpop.xlane.xlu0 %495
    %v497 = vadd.f32 %v346, %v347
    %v498 = vadd.f32 %v497, %v348
    %v499 = vadd.f32 %v498, %v349
    %v500 = vadd.f32 %v499, %v350
    %v501 = vadd.f32 %v500, %v351
    %v502 = vadd.f32 %v501, %v352
    %v503 = vadd.f32 %v502, %v353
    %v504 = vadd.f32 %v503, %v354
    %v505 = vadd.f32 %v504, %v355
    %v506 = vadd.f32 %v505, %v356
    %v507 = vadd.f32 %v506, %v357
    %v508 = vadd.f32 %v507, %v358
    %v509 = vadd.f32 %v508, %v359
    %v510 = vadd.f32 %v509, %v360
    %v511 = vadd.f32 %v510, %v361
    %512 = vadd.xlane.f32.xlu0 %v511
    %v513 = vpop.xlane.xlu0 %512
    %v514 = vadd.f32 %v362, %v363
    %v515 = vadd.f32 %v514, %v364
    %v516 = vadd.f32 %v515, %v365
    %v517 = vadd.f32 %v516, %v366
    %v518 = vadd.f32 %v517, %v367
    %v519 = vadd.f32 %v518, %v368
    %v520 = vadd.f32 %v519, %v369
    %v521 = vadd.f32 %v520, %v370
    %v522 = vadd.f32 %v521, %v371
    %v523 = vadd.f32 %v522, %v372
    %v524 = vadd.f32 %v523, %v373
    %v525 = vadd.f32 %v524, %v374
    %v526 = vadd.f32 %v525, %v375
    %v527 = vadd.f32 %v526, %v376
    %v528 = vadd.f32 %v527, %v377
    %529 = vadd.xlane.f32.xlu0 %v528
    %v530 = vpop.xlane.xlu0 %529
    %531 = vmatprep.subr.mxu0 0.0
    %532 = vmatpush1.xpose.msra.mxu0 0.0
    %533 = vmatprep.subr.mxu0 0.0
    %534 = vmatpush1.xpose.msra.mxu0 0.0
    %535 = vmatprep.subr.mxu0 0.0
    %536 = vmatpush1.xpose.msra.mxu0 0.0
    %537 = vmatprep.subr.mxu0 0.0
    %538 = vmatpush1.xpose.msra.mxu0 0.0
    %539 = vmatprep.subr.mxu0 0.0
    %540 = vmatpush1.xpose.msra.mxu0 0.0
    %541 = vmatprep.subr.mxu0 0.0
    %542 = vmatpush1.xpose.msra.mxu0 0.0
    %543 = vmatprep.subr.mxu0 0.0
    %544 = vmatpush1.xpose.msra.mxu0 0.0
    %545 = vmatprep.subr.mxu0 %v185
    %546 = vmatpush1.xpose.msra.mxu0 %v184
    %547 = vmatprep.subr.mxu0 %v169
    %548 = vmatpush1.xpose.msra.mxu0 %v168
    %549 = vmatprep.subr.mxu0 %v153
    %550 = vmatpush1.xpose.msra.mxu0 %v152
    %551 = vmatprep.subr.mxu0 %v137
    %552 = vmatpush1.xpose.msra.mxu0 %v136
    %553 = vmatprep.subr.mxu0 %v121
    %554 = vmatpush1.xpose.msra.mxu0 %v120
    %555 = vmatprep.subr.mxu0 %v105
    %556 = vmatpush1.xpose.msra.mxu0 %v104
    %557 = vmatprep.subr.mxu0 %v89
    %558 = vmatpush1.xpose.msra.mxu0 %v88
    %559 = vmatprep.subr.mxu0 %v73
    %560 = vmatpush1.xpose.msra.mxu0 %v72
    %561 = vmatprep.subr.mxu0 %v57
    %562 = vmatpush1.xpose.msra.mxu0 %v56
    %563 = vmatprep.subr.mxu0 0.0
    %564 = vmatpush2.xpose.msra.mxu0 0.0
    %565 = vmatprep.subr.mxu0 0.0
    %566 = vmatpush2.xpose.msra.mxu0 0.0
    %567 = vmatprep.subr.mxu0 0.0
    %568 = vmatpush2.xpose.msra.mxu0 0.0
    %569 = vmatprep.subr.mxu0 0.0
    %570 = vmatpush2.xpose.msra.mxu0 0.0
    %571 = vmatprep.subr.mxu0 0.0
    %572 = vmatpush2.xpose.msra.mxu0 0.0
    %573 = vmatprep.subr.mxu0 0.0
    %574 = vmatpush2.xpose.msra.mxu0 0.0
    %575 = vmatprep.subr.mxu0 0.0
    %576 = vmatpush2.xpose.msra.mxu0 0.0
    %577 = vmatprep.subr.mxu0 0.0
    %578 = vmatpush2.xpose.msra.mxu0 0.0
    %579 = vmatprep.subr.mxu0 0.0
    %580 = vmatpush2.xpose.msra.mxu0 0.0
    %581 = vmatprep.subr.mxu0 0.0
    %582 = vmatpush2.xpose.msra.mxu0 0.0
    %583 = vmatprep.subr.mxu0 0.0
    %584 = vmatpush2.xpose.msra.mxu0 0.0
    %585 = vmatprep.subr.mxu0 0.0
    %586 = vmatpush2.xpose.msra.mxu0 0.0
    %587 = vmatprep.subr.mxu0 0.0
    %588 = vmatpush2.xpose.msra.mxu0 0.0
    %589 = vmatprep.subr.mxu0 0.0
    %590 = vmatpush2.xpose.msra.mxu0 0.0
    %591 = vmatprep.subr.mxu0 0.0
    %592 = vmatpush2.xpose.msra.mxu0 0.0
    %593 = vmatprep.subr.mxu0 0.0
    %594 = vmatpush2.xpose.msra.mxu0 0.0
    %595 = vmatprep.mubr.f32.mxu0 %v41
    %596 = vmatmul.mubr.f32.gmra.mxu0 %v40
    %v597 = vpop.f32.mrf.mxu0
    %v598 = vadd.f32 0.0, %v597
    %v599 = vpop.f32.mrf.mxu0
    %600 = vdwg.mxu0
    %601 = vmatprep.subr.mxu0 0.0
    %602 = vmatpush1.xpose.msra.mxu0 0.0
    %603 = vmatprep.subr.mxu0 0.0
    %604 = vmatpush1.xpose.msra.mxu0 0.0
    %605 = vmatprep.subr.mxu0 0.0
    %606 = vmatpush1.xpose.msra.mxu0 0.0
    %607 = vmatprep.subr.mxu0 0.0
    %608 = vmatpush1.xpose.msra.mxu0 0.0
    %609 = vmatprep.subr.mxu0 0.0
    %610 = vmatpush1.xpose.msra.mxu0 0.0
    %611 = vmatprep.subr.mxu0 0.0
    %612 = vmatpush1.xpose.msra.mxu0 0.0
    %613 = vmatprep.subr.mxu0 0.0
    %614 = vmatpush1.xpose.msra.mxu0 0.0
    %615 = vmatprep.subr.mxu0 %v187
    %616 = vmatpush1.xpose.msra.mxu0 %v186
    %617 = vmatprep.subr.mxu0 %v171
    %618 = vmatpush1.xpose.msra.mxu0 %v170
    %619 = vmatprep.subr.mxu0 %v155
    %620 = vmatpush1.xpose.msra.mxu0 %v154
    %621 = vmatprep.subr.mxu0 %v139
    %622 = vmatpush1.xpose.msra.mxu0 %v138
    %623 = vmatprep.subr.mxu0 %v123
    %624 = vmatpush1.xpose.msra.mxu0 %v122
    %625 = vmatprep.subr.mxu0 %v107
    %626 = vmatpush1.xpose.msra.mxu0 %v106
    %627 = vmatprep.subr.mxu0 %v91
    %628 = vmatpush1.xpose.msra.mxu0 %v90
    %629 = vmatprep.subr.mxu0 %v75
    %630 = vmatpush1.xpose.msra.mxu0 %v74
    %631 = vmatprep.subr.mxu0 %v59
    %632 = vmatpush1.xpose.msra.mxu0 %v58
    %633 = vmatprep.subr.mxu0 0.0
    %634 = vmatpush2.xpose.msra.mxu0 0.0
    %635 = vmatprep.subr.mxu0 0.0
    %636 = vmatpush2.xpose.msra.mxu0 0.0
    %637 = vmatprep.subr.mxu0 0.0
    %638 = vmatpush2.xpose.msra.mxu0 0.0
    %639 = vmatprep.subr.mxu0 0.0
    %640 = vmatpush2.xpose.msra.mxu0 0.0
    %641 = vmatprep.subr.mxu0 0.0
    %642 = vmatpush2.xpose.msra.mxu0 0.0
    %643 = vmatprep.subr.mxu0 0.0
    %644 = vmatpush2.xpose.msra.mxu0 0.0
    %645 = vmatprep.subr.mxu0 0.0
    %646 = vmatpush2.xpose.msra.mxu0 0.0
    %647 = vmatprep.subr.mxu0 0.0
    %648 = vmatpush2.xpose.msra.mxu0 0.0
    %649 = vmatprep.subr.mxu0 0.0
    %650 = vmatpush2.xpose.msra.mxu0 0.0
    %651 = vmatprep.subr.mxu0 0.0
    %652 = vmatpush2.xpose.msra.mxu0 0.0
    %653 = vmatprep.subr.mxu0 0.0
    %654 = vmatpush2.xpose.msra.mxu0 0.0
    %655 = vmatprep.subr.mxu0 0.0
    %656 = vmatpush2.xpose.msra.mxu0 0.0
    %657 = vmatprep.subr.mxu0 0.0
    %658 = vmatpush2.xpose.msra.mxu0 0.0
    %659 = vmatprep.subr.mxu0 0.0
    %660 = vmatpush2.xpose.msra.mxu0 0.0
    %661 = vmatprep.subr.mxu0 0.0
    %662 = vmatpush2.xpose.msra.mxu0 0.0
    %663 = vmatprep.subr.mxu0 0.0
    %664 = vmatpush2.xpose.msra.mxu0 0.0
    %665 = vmatprep.mubr.f32.mxu0 %v43
    %666 = vmatmul.mubr.f32.gmra.mxu0 %v42
    %v667 = vpop.f32.mrf.mxu0
    %v668 = vadd.f32 %v598, %v667
    %v669 = vpop.f32.mrf.mxu0
    %670 = vdwg.mxu0
    %671 = vmatprep.subr.mxu0 0.0
    %672 = vmatpush1.xpose.msra.mxu0 0.0
    %673 = vmatprep.subr.mxu0 0.0
    %674 = vmatpush1.xpose.msra.mxu0 0.0
    %675 = vmatprep.subr.mxu0 0.0
    %676 = vmatpush1.xpose.msra.mxu0 0.0
    %677 = vmatprep.subr.mxu0 0.0
    %678 = vmatpush1.xpose.msra.mxu0 0.0
    %679 = vmatprep.subr.mxu0 0.0
    %680 = vmatpush1.xpose.msra.mxu0 0.0
    %681 = vmatprep.subr.mxu0 0.0
    %682 = vmatpush1.xpose.msra.mxu0 0.0
    %683 = vmatprep.subr.mxu0 0.0
    %684 = vmatpush1.xpose.msra.mxu0 0.0
    %685 = vmatprep.subr.mxu0 %v189
    %686 = vmatpush1.xpose.msra.mxu0 %v188
    %687 = vmatprep.subr.mxu0 %v173
    %688 = vmatpush1.xpose.msra.mxu0 %v172
    %689 = vmatprep.subr.mxu0 %v157
    %690 = vmatpush1.xpose.msra.mxu0 %v156
    %691 = vmatprep.subr.mxu0 %v141
    %692 = vmatpush1.xpose.msra.mxu0 %v140
    %693 = vmatprep.subr.mxu0 %v125
    %694 = vmatpush1.xpose.msra.mxu0 %v124
    %695 = vmatprep.subr.mxu0 %v109
    %696 = vmatpush1.xpose.msra.mxu0 %v108
    %697 = vmatprep.subr.mxu0 %v93
    %698 = vmatpush1.xpose.msra.mxu0 %v92
    %699 = vmatprep.subr.mxu0 %v77
    %700 = vmatpush1.xpose.msra.mxu0 %v76
    %701 = vmatprep.subr.mxu0 %v61
    %702 = vmatpush1.xpose.msra.mxu0 %v60
    %703 = vmatprep.subr.mxu0 0.0
    %704 = vmatpush2.xpose.msra.mxu0 0.0
    %705 = vmatprep.subr.mxu0 0.0
    %706 = vmatpush2.xpose.msra.mxu0 0.0
    %707 = vmatprep.subr.mxu0 0.0
    %708 = vmatpush2.xpose.msra.mxu0 0.0
    %709 = vmatprep.subr.mxu0 0.0
    %710 = vmatpush2.xpose.msra.mxu0 0.0
    %711 = vmatprep.subr.mxu0 0.0
    %712 = vmatpush2.xpose.msra.mxu0 0.0
    %713 = vmatprep.subr.mxu0 0.0
    %714 = vmatpush2.xpose.msra.mxu0 0.0
    %715 = vmatprep.subr.mxu0 0.0
    %716 = vmatpush2.xpose.msra.mxu0 0.0
    %717 = vmatprep.subr.mxu0 0.0
    %718 = vmatpush2.xpose.msra.mxu0 0.0
    %719 = vmatprep.subr.mxu0 0.0
    %720 = vmatpush2.xpose.msra.mxu0 0.0
    %721 = vmatprep.subr.mxu0 0.0
    %722 = vmatpush2.xpose.msra.mxu0 0.0
    %723 = vmatprep.subr.mxu0 0.0
    %724 = vmatpush2.xpose.msra.mxu0 0.0
    %725 = vmatprep.subr.mxu0 0.0
    %726 = vmatpush2.xpose.msra.mxu0 0.0
    %727 = vmatprep.subr.mxu0 0.0
    %728 = vmatpush2.xpose.msra.mxu0 0.0
    %729 = vmatprep.subr.mxu0 0.0
    %730 = vmatpush2.xpose.msra.mxu0 0.0
    %731 = vmatprep.subr.mxu0 0.0
    %732 = vmatpush2.xpose.msra.mxu0 0.0
    %733 = vmatprep.subr.mxu0 0.0
    %734 = vmatpush2.xpose.msra.mxu0 0.0
    %735 = vmatprep.mubr.f32.mxu0 %v45
    %736 = vmatmul.mubr.f32.gmra.mxu0 %v44
    %v737 = vpop.f32.mrf.mxu0
    %v738 = vadd.f32 %v668, %v737
    %v739 = vpop.f32.mrf.mxu0
    %740 = vdwg.mxu0
    %741 = vmatprep.subr.mxu0 0.0
    %742 = vmatpush1.xpose.msra.mxu0 0.0
    %743 = vmatprep.subr.mxu0 0.0
    %744 = vmatpush1.xpose.msra.mxu0 0.0
    %745 = vmatprep.subr.mxu0 0.0
    %746 = vmatpush1.xpose.msra.mxu0 0.0
    %747 = vmatprep.subr.mxu0 0.0
    %748 = vmatpush1.xpose.msra.mxu0 0.0
    %749 = vmatprep.subr.mxu0 0.0
    %750 = vmatpush1.xpose.msra.mxu0 0.0
    %751 = vmatprep.subr.mxu0 0.0
    %752 = vmatpush1.xpose.msra.mxu0 0.0
    %753 = vmatprep.subr.mxu0 0.0
    %754 = vmatpush1.xpose.msra.mxu0 0.0
    %755 = vmatprep.subr.mxu0 %v191
    %756 = vmatpush1.xpose.msra.mxu0 %v190
    %757 = vmatprep.subr.mxu0 %v175
    %758 = vmatpush1.xpose.msra.mxu0 %v174
    %759 = vmatprep.subr.mxu0 %v159
    %760 = vmatpush1.xpose.msra.mxu0 %v158
    %761 = vmatprep.subr.mxu0 %v143
    %762 = vmatpush1.xpose.msra.mxu0 %v142
    %763 = vmatprep.subr.mxu0 %v127
    %764 = vmatpush1.xpose.msra.mxu0 %v126
    %765 = vmatprep.subr.mxu0 %v111
    %766 = vmatpush1.xpose.msra.mxu0 %v110
    %767 = vmatprep.subr.mxu0 %v95
    %768 = vmatpush1.xpose.msra.mxu0 %v94
    %769 = vmatprep.subr.mxu0 %v79
    %770 = vmatpush1.xpose.msra.mxu0 %v78
    %771 = vmatprep.subr.mxu0 %v63
    %772 = vmatpush1.xpose.msra.mxu0 %v62
    %773 = vmatprep.subr.mxu0 0.0
    %774 = vmatpush2.xpose.msra.mxu0 0.0
    %775 = vmatprep.subr.mxu0 0.0
    %776 = vmatpush2.xpose.msra.mxu0 0.0
    %777 = vmatprep.subr.mxu0 0.0
    %778 = vmatpush2.xpose.msra.mxu0 0.0
    %779 = vmatprep.subr.mxu0 0.0
    %780 = vmatpush2.xpose.msra.mxu0 0.0
    %781 = vmatprep.subr.mxu0 0.0
    %782 = vmatpush2.xpose.msra.mxu0 0.0
    %783 = vmatprep.subr.mxu0 0.0
    %784 = vmatpush2.xpose.msra.mxu0 0.0
    %785 = vmatprep.subr.mxu0 0.0
    %786 = vmatpush2.xpose.msra.mxu0 0.0
    %787 = vmatprep.subr.mxu0 0.0
    %788 = vmatpush2.xpose.msra.mxu0 0.0
    %789 = vmatprep.subr.mxu0 0.0
    %790 = vmatpush2.xpose.msra.mxu0 0.0
    %791 = vmatprep.subr.mxu0 0.0
    %792 = vmatpush2.xpose.msra.mxu0 0.0
    %793 = vmatprep.subr.mxu0 0.0
    %794 = vmatpush2.xpose.msra.mxu0 0.0
    %795 = vmatprep.subr.mxu0 0.0
    %796 = vmatpush2.xpose.msra.mxu0 0.0
    %797 = vmatprep.subr.mxu0 0.0
    %798 = vmatpush2.xpose.msra.mxu0 0.0
    %799 = vmatprep.subr.mxu0 0.0
    %800 = vmatpush2.xpose.msra.mxu0 0.0
    %801 = vmatprep.subr.mxu0 0.0
    %802 = vmatpush2.xpose.msra.mxu0 0.0
    %803 = vmatprep.subr.mxu0 0.0
    %804 = vmatpush2.xpose.msra.mxu0 0.0
    %805 = vmatprep.mubr.f32.mxu0 %v47
    %806 = vmatmul.mubr.f32.gmra.mxu0 %v46
    %v807 = vpop.f32.mrf.mxu0
    %v808 = vadd.f32 %v738, %v807
    %v809 = vpop.f32.mrf.mxu0
    %810 = vdwg.mxu0
    %811 = vmatprep.subr.mxu0 0.0
    %812 = vmatpush1.xpose.msra.mxu0 0.0
    %813 = vmatprep.subr.mxu0 0.0
    %814 = vmatpush1.xpose.msra.mxu0 0.0
    %815 = vmatprep.subr.mxu0 0.0
    %816 = vmatpush1.xpose.msra.mxu0 0.0
    %817 = vmatprep.subr.mxu0 0.0
    %818 = vmatpush1.xpose.msra.mxu0 0.0
    %819 = vmatprep.subr.mxu0 0.0
    %820 = vmatpush1.xpose.msra.mxu0 0.0
    %821 = vmatprep.subr.mxu0 0.0
    %822 = vmatpush1.xpose.msra.mxu0 0.0
    %823 = vmatprep.subr.mxu0 0.0
    %824 = vmatpush1.xpose.msra.mxu0 0.0
    %825 = vmatprep.subr.mxu0 %v193
    %826 = vmatpush1.xpose.msra.mxu0 %v192
    %827 = vmatprep.subr.mxu0 %v177
    %828 = vmatpush1.xpose.msra.mxu0 %v176
    %829 = vmatprep.subr.mxu0 %v161
    %830 = vmatpush1.xpose.msra.mxu0 %v160
    %831 = vmatprep.subr.mxu0 %v145
    %832 = vmatpush1.xpose.msra.mxu0 %v144
    %833 = vmatprep.subr.mxu0 %v129
    %834 = vmatpush1.xpose.msra.mxu0 %v128
    %835 = vmatprep.subr.mxu0 %v113
    %836 = vmatpush1.xpose.msra.mxu0 %v112
    %837 = vmatprep.subr.mxu0 %v97
    %838 = vmatpush1.xpose.msra.mxu0 %v96
    %839 = vmatprep.subr.mxu0 %v81
    %840 = vmatpush1.xpose.msra.mxu0 %v80
    %841 = vmatprep.subr.mxu0 %v65
    %842 = vmatpush1.xpose.msra.mxu0 %v64
    %843 = vmatprep.subr.mxu0 0.0
    %844 = vmatpush2.xpose.msra.mxu0 0.0
    %845 = vmatprep.subr.mxu0 0.0
    %846 = vmatpush2.xpose.msra.mxu0 0.0
    %847 = vmatprep.subr.mxu0 0.0
    %848 = vmatpush2.xpose.msra.mxu0 0.0
    %849 = vmatprep.subr.mxu0 0.0
    %850 = vmatpush2.xpose.msra.mxu0 0.0
    %851 = vmatprep.subr.mxu0 0.0
    %852 = vmatpush2.xpose.msra.mxu0 0.0
    %853 = vmatprep.subr.mxu0 0.0
    %854 = vmatpush2.xpose.msra.mxu0 0.0
    %855 = vmatprep.subr.mxu0 0.0
    %856 = vmatpush2.xpose.msra.mxu0 0.0
    %857 = vmatprep.subr.mxu0 0.0
    %858 = vmatpush2.xpose.msra.mxu0 0.0
    %859 = vmatprep.subr.mxu0 0.0
    %860 = vmatpush2.xpose.msra.mxu0 0.0
    %861 = vmatprep.subr.mxu0 0.0
    %862 = vmatpush2.xpose.msra.mxu0 0.0
    %863 = vmatprep.subr.mxu0 0.0
    %864 = vmatpush2.xpose.msra.mxu0 0.0
    %865 = vmatprep.subr.mxu0 0.0
    %866 = vmatpush2.xpose.msra.mxu0 0.0
    %867 = vmatprep.subr.mxu0 0.0
    %868 = vmatpush2.xpose.msra.mxu0 0.0
    %869 = vmatprep.subr.mxu0 0.0
    %870 = vmatpush2.xpose.msra.mxu0 0.0
    %871 = vmatprep.subr.mxu0 0.0
    %872 = vmatpush2.xpose.msra.mxu0 0.0
    %873 = vmatprep.subr.mxu0 0.0
    %874 = vmatpush2.xpose.msra.mxu0 0.0
    %875 = vmatprep.mubr.f32.mxu0 %v49
    %876 = vmatmul.mubr.f32.gmra.mxu0 %v48
    %v877 = vpop.f32.mrf.mxu0
    %v878 = vadd.f32 %v808, %v877
    %v879 = vpop.f32.mrf.mxu0
    %880 = vdwg.mxu0
    %881 = vmatprep.subr.mxu0 0.0
    %882 = vmatpush1.xpose.msra.mxu0 0.0
    %883 = vmatprep.subr.mxu0 0.0
    %884 = vmatpush1.xpose.msra.mxu0 0.0
    %885 = vmatprep.subr.mxu0 0.0
    %886 = vmatpush1.xpose.msra.mxu0 0.0
    %887 = vmatprep.subr.mxu0 0.0
    %888 = vmatpush1.xpose.msra.mxu0 0.0
    %889 = vmatprep.subr.mxu0 0.0
    %890 = vmatpush1.xpose.msra.mxu0 0.0
    %891 = vmatprep.subr.mxu0 0.0
    %892 = vmatpush1.xpose.msra.mxu0 0.0
    %893 = vmatprep.subr.mxu0 0.0
    %894 = vmatpush1.xpose.msra.mxu0 0.0
    %895 = vmatprep.subr.mxu0 %v195
    %896 = vmatpush1.xpose.msra.mxu0 %v194
    %897 = vmatprep.subr.mxu0 %v179
    %898 = vmatpush1.xpose.msra.mxu0 %v178
    %899 = vmatprep.subr.mxu0 %v163
    %900 = vmatpush1.xpose.msra.mxu0 %v162
    %901 = vmatprep.subr.mxu0 %v147
    %902 = vmatpush1.xpose.msra.mxu0 %v146
    %903 = vmatprep.subr.mxu0 %v131
    %904 = vmatpush1.xpose.msra.mxu0 %v130
    %905 = vmatprep.subr.mxu0 %v115
    %906 = vmatpush1.xpose.msra.mxu0 %v114
    %907 = vmatprep.subr.mxu0 %v99
    %908 = vmatpush1.xpose.msra.mxu0 %v98
    %909 = vmatprep.subr.mxu0 %v83
    %910 = vmatpush1.xpose.msra.mxu0 %v82
    %911 = vmatprep.subr.mxu0 %v67
    %912 = vmatpush1.xpose.msra.mxu0 %v66
    %913 = vmatprep.subr.mxu0 0.0
    %914 = vmatpush2.xpose.msra.mxu0 0.0
    %915 = vmatprep.subr.mxu0 0.0
    %916 = vmatpush2.xpose.msra.mxu0 0.0
    %917 = vmatprep.subr.mxu0 0.0
    %918 = vmatpush2.xpose.msra.mxu0 0.0
    %919 = vmatprep.subr.mxu0 0.0
    %920 = vmatpush2.xpose.msra.mxu0 0.0
    %921 = vmatprep.subr.mxu0 0.0
    %922 = vmatpush2.xpose.msra.mxu0 0.0
    %923 = vmatprep.subr.mxu0 0.0
    %924 = vmatpush2.xpose.msra.mxu0 0.0
    %925 = vmatprep.subr.mxu0 0.0
    %926 = vmatpush2.xpose.msra.mxu0 0.0
    %927 = vmatprep.subr.mxu0 0.0
    %928 = vmatpush2.xpose.msra.mxu0 0.0
    %929 = vmatprep.subr.mxu0 0.0
    %930 = vmatpush2.xpose.msra.mxu0 0.0
    %931 = vmatprep.subr.mxu0 0.0
    %932 = vmatpush2.xpose.msra.mxu0 0.0
    %933 = vmatprep.subr.mxu0 0.0
    %934 = vmatpush2.xpose.msra.mxu0 0.0
    %935 = vmatprep.subr.mxu0 0.0
    %936 = vmatpush2.xpose.msra.mxu0 0.0
    %937 = vmatprep.subr.mxu0 0.0
    %938 = vmatpush2.xpose.msra.mxu0 0.0
    %939 = vmatprep.subr.mxu0 0.0
    %940 = vmatpush2.xpose.msra.mxu0 0.0
    %941 = vmatprep.subr.mxu0 0.0
    %942 = vmatpush2.xpose.msra.mxu0 0.0
    %943 = vmatprep.subr.mxu0 0.0
    %944 = vmatpush2.xpose.msra.mxu0 0.0
    %945 = vmatprep.mubr.f32.mxu0 %v51
    %946 = vmatmul.mubr.f32.gmra.mxu0 %v50
    %v947 = vpop.f32.mrf.mxu0
    %v948 = vadd.f32 %v878, %v947
    %v949 = vpop.f32.mrf.mxu0
    %950 = vdwg.mxu0
    %951 = vmatprep.subr.mxu0 0.0
    %952 = vmatpush1.xpose.msra.mxu0 0.0
    %953 = vmatprep.subr.mxu0 0.0
    %954 = vmatpush1.xpose.msra.mxu0 0.0
    %955 = vmatprep.subr.mxu0 0.0
    %956 = vmatpush1.xpose.msra.mxu0 0.0
    %957 = vmatprep.subr.mxu0 0.0
    %958 = vmatpush1.xpose.msra.mxu0 0.0
    %959 = vmatprep.subr.mxu0 0.0
    %960 = vmatpush1.xpose.msra.mxu0 0.0
    %961 = vmatprep.subr.mxu0 0.0
    %962 = vmatpush1.xpose.msra.mxu0 0.0
    %963 = vmatprep.subr.mxu0 0.0
    %964 = vmatpush1.xpose.msra.mxu0 0.0
    %965 = vmatprep.subr.mxu0 %v197
    %966 = vmatpush1.xpose.msra.mxu0 %v196
    %967 = vmatprep.subr.mxu0 %v181
    %968 = vmatpush1.xpose.msra.mxu0 %v180
    %969 = vmatprep.subr.mxu0 %v165
    %970 = vmatpush1.xpose.msra.mxu0 %v164
    %971 = vmatprep.subr.mxu0 %v149
    %972 = vmatpush1.xpose.msra.mxu0 %v148
    %973 = vmatprep.subr.mxu0 %v133
    %974 = vmatpush1.xpose.msra.mxu0 %v132
    %975 = vmatprep.subr.mxu0 %v117
    %976 = vmatpush1.xpose.msra.mxu0 %v116
    %977 = vmatprep.subr.mxu0 %v101
    %978 = vmatpush1.xpose.msra.mxu0 %v100
    %979 = vmatprep.subr.mxu0 %v85
    %980 = vmatpush1.xpose.msra.mxu0 %v84
    %981 = vmatprep.subr.mxu0 %v69
    %982 = vmatpush1.xpose.msra.mxu0 %v68
    %983 = vmatprep.subr.mxu0 0.0
    %984 = vmatpush2.xpose.msra.mxu0 0.0
    %985 = vmatprep.subr.mxu0 0.0
    %986 = vmatpush2.xpose.msra.mxu0 0.0
    %987 = vmatprep.subr.mxu0 0.0
    %988 = vmatpush2.xpose.msra.mxu0 0.0
    %989 = vmatprep.subr.mxu0 0.0
    %990 = vmatpush2.xpose.msra.mxu0 0.0
    %991 = vmatprep.subr.mxu0 0.0
    %992 = vmatpush2.xpose.msra.mxu0 0.0
    %993 = vmatprep.subr.mxu0 0.0
    %994 = vmatpush2.xpose.msra.mxu0 0.0
    %995 = vmatprep.subr.mxu0 0.0
    %996 = vmatpush2.xpose.msra.mxu0 0.0
    %997 = vmatprep.subr.mxu0 0.0
    %998 = vmatpush2.xpose.msra.mxu0 0.0
    %999 = vmatprep.subr.mxu0 0.0
    %1000 = vmatpush2.xpose.msra.mxu0 0.0
    %1001 = vmatprep.subr.mxu0 0.0
    %1002 = vmatpush2.xpose.msra.mxu0 0.0
    %1003 = vmatprep.subr.mxu0 0.0
    %1004 = vmatpush2.xpose.msra.mxu0 0.0
    %1005 = vmatprep.subr.mxu0 0.0
    %1006 = vmatpush2.xpose.msra.mxu0 0.0
    %1007 = vmatprep.subr.mxu0 0.0
    %1008 = vmatpush2.xpose.msra.mxu0 0.0
    %1009 = vmatprep.subr.mxu0 0.0
    %1010 = vmatpush2.xpose.msra.mxu0 0.0
    %1011 = vmatprep.subr.mxu0 0.0
    %1012 = vmatpush2.xpose.msra.mxu0 0.0
    %1013 = vmatprep.subr.mxu0 0.0
    %1014 = vmatpush2.xpose.msra.mxu0 0.0
    %1015 = vmatprep.mubr.f32.mxu0 %v53
    %1016 = vmatmul.mubr.f32.gmra.mxu0 %v52
    %v1017 = vpop.f32.mrf.mxu0
    %v1018 = vadd.f32 %v948, %v1017
    %v1019 = vpop.f32.mrf.mxu0
    %1020 = vdwg.mxu0
    %1021 = vmatprep.subr.mxu0 0.0
    %1022 = vmatpush1.xpose.msra.mxu0 0.0
    %1023 = vmatprep.subr.mxu0 0.0
    %1024 = vmatpush1.xpose.msra.mxu0 0.0
    %1025 = vmatprep.subr.mxu0 0.0
    %1026 = vmatpush1.xpose.msra.mxu0 0.0
    %1027 = vmatprep.subr.mxu0 0.0
    %1028 = vmatpush1.xpose.msra.mxu0 0.0
    %1029 = vmatprep.subr.mxu0 0.0
    %1030 = vmatpush1.xpose.msra.mxu0 0.0
    %1031 = vmatprep.subr.mxu0 0.0
    %1032 = vmatpush1.xpose.msra.mxu0 0.0
    %1033 = vmatprep.subr.mxu0 0.0
    %1034 = vmatpush1.xpose.msra.mxu0 0.0
    %1035 = vmatprep.subr.mxu0 %v199
    %1036 = vmatpush1.xpose.msra.mxu0 %v198
    %1037 = vmatprep.subr.mxu0 %v183
    %1038 = vmatpush1.xpose.msra.mxu0 %v182
    %1039 = vmatprep.subr.mxu0 %v167
    %1040 = vmatpush1.xpose.msra.mxu0 %v166
    %1041 = vmatprep.subr.mxu0 %v151
    %1042 = vmatpush1.xpose.msra.mxu0 %v150
    %1043 = vmatprep.subr.mxu0 %v135
    %1044 = vmatpush1.xpose.msra.mxu0 %v134
    %1045 = vmatprep.subr.mxu0 %v119
    %1046 = vmatpush1.xpose.msra.mxu0 %v118
    %1047 = vmatprep.subr.mxu0 %v103
    %1048 = vmatpush1.xpose.msra.mxu0 %v102
    %1049 = vmatprep.subr.mxu0 %v87
    %1050 = vmatpush1.xpose.msra.mxu0 %v86
    %1051 = vmatprep.subr.mxu0 %v71
    %1052 = vmatpush1.xpose.msra.mxu0 %v70
    %1053 = vmatprep.subr.mxu0 0.0
    %1054 = vmatpush2.xpose.msra.mxu0 0.0
    %1055 = vmatprep.subr.mxu0 0.0
    %1056 = vmatpush2.xpose.msra.mxu0 0.0
    %1057 = vmatprep.subr.mxu0 0.0
    %1058 = vmatpush2.xpose.msra.mxu0 0.0
    %1059 = vmatprep.subr.mxu0 0.0
    %1060 = vmatpush2.xpose.msra.mxu0 0.0
    %1061 = vmatprep.subr.mxu0 0.0
    %1062 = vmatpush2.xpose.msra.mxu0 0.0
    %1063 = vmatprep.subr.mxu0 0.0
    %1064 = vmatpush2.xpose.msra.mxu0 0.0
    %1065 = vmatprep.subr.mxu0 0.0
    %1066 = vmatpush2.xpose.msra.mxu0 0.0
    %1067 = vmatprep.subr.mxu0 0.0
    %1068 = vmatpush2.xpose.msra.mxu0 0.0
    %1069 = vmatprep.subr.mxu0 0.0
    %1070 = vmatpush2.xpose.msra.mxu0 0.0
    %1071 = vmatprep.subr.mxu0 0.0
    %1072 = vmatpush2.xpose.msra.mxu0 0.0
    %1073 = vmatprep.subr.mxu0 0.0
    %1074 = vmatpush2.xpose.msra.mxu0 0.0
    %1075 = vmatprep.subr.mxu0 0.0
    %1076 = vmatpush2.xpose.msra.mxu0 0.0
    %1077 = vmatprep.subr.mxu0 0.0
    %1078 = vmatpush2.xpose.msra.mxu0 0.0
    %1079 = vmatprep.subr.mxu0 0.0
    %1080 = vmatpush2.xpose.msra.mxu0 0.0
    %1081 = vmatprep.subr.mxu0 0.0
    %1082 = vmatpush2.xpose.msra.mxu0 0.0
    %1083 = vmatprep.subr.mxu0 0.0
    %1084 = vmatpush2.xpose.msra.mxu0 0.0
    %1085 = vmatprep.mubr.f32.mxu0 %v55
    %1086 = vmatmul.mubr.f32.gmra.mxu0 %v54
    %v1087 = vpop.f32.mrf.mxu0
    %v1088 = vadd.f32 %v1018, %v1087
    %v1089 = vpop.f32.mrf.mxu0
    %1090 = vdwg.mxu0
    %v1091 = vmul.f32 %v1088, 2.0
    %v1092 = vsub.f32 %v233, %v1091
    %v1102 = vlaneseq
    %v1103 = vand.u32 %v1102, 127
    %v1104 = vlaneseq
    %v1105 = vshrl.u32 %v1104, 7
    %v1106 = vsub.s32 %v1103, %v1105
    %v1107 = vrot.slane %v394, %v1106
    %v1108 = vadd.s32 %v1103, 4294967288
    %v1109 = vlaneseq
    %v1110 = vshrl.u32 %v1109, 7
    %v1111 = vsub.s32 %v1108, %v1110
    %v1112 = vrot.slane %v411, %v1111
    %vm1113 = vcmask 130112
    %v1114 = vsel %vm1113, %v1112, %v1107
    %v1115 = vadd.s32 %v1103, 4294967280
    %v1116 = vlaneseq
    %v1117 = vshrl.u32 %v1116, 7
    %v1118 = vsub.s32 %v1115, %v1117
    %v1119 = vrot.slane %v428, %v1118
    %vm1120 = vcmask 195712
    %v1121 = vsel %vm1120, %v1119, %v1114
    %v1122 = vadd.s32 %v1103, 4294967272
    %v1123 = vlaneseq
    %v1124 = vshrl.u32 %v1123, 7
    %v1125 = vsub.s32 %v1122, %v1124
    %v1126 = vrot.slane %v445, %v1125
    %vm1127 = vcmask 261312
    %v1128 = vsel %vm1127, %v1126, %v1121
    %v1129 = vadd.s32 %v1103, 4294967264
    %v1130 = vlaneseq
    %v1131 = vshrl.u32 %v1130, 7
    %v1132 = vsub.s32 %v1129, %v1131
    %v1133 = vrot.slane %v462, %v1132
    %vm1134 = vcmask 326912
    %v1135 = vsel %vm1134, %v1133, %v1128
    %v1136 = vadd.s32 %v1103, 4294967256
    %v1137 = vlaneseq
    %v1138 = vshrl.u32 %v1137, 7
    %v1139 = vsub.s32 %v1136, %v1138
    %v1140 = vrot.slane %v479, %v1139
    %vm1141 = vcmask 392512
    %v1142 = vsel %vm1141, %v1140, %v1135
    %v1143 = vadd.s32 %v1103, 4294967248
    %v1144 = vlaneseq
    %v1145 = vshrl.u32 %v1144, 7
    %v1146 = vsub.s32 %v1143, %v1145
    %v1147 = vrot.slane %v496, %v1146
    %vm1148 = vcmask 458112
    %v1149 = vsel %vm1148, %v1147, %v1142
    %v1150 = vadd.s32 %v1103, 4294967240
    %v1151 = vlaneseq
    %v1152 = vshrl.u32 %v1151, 7
    %v1153 = vsub.s32 %v1150, %v1152
    %v1154 = vrot.slane %v513, %v1153
    %vm1155 = vcmask 523712
    %v1156 = vsel %vm1155, %v1154, %v1149
    %v1157 = vadd.s32 %v1103, 4294967232
    %v1158 = vlaneseq
    %v1159 = vshrl.u32 %v1158, 7
    %v1160 = vsub.s32 %v1157, %v1159
    %v1161 = vrot.slane %v530, %v1160
    %vm1162 = vcmask 589312
    %v1163 = vsel %vm1162, %v1161, %v1156
    %vm1164 = vcmask 1042434
    %v1165 = vsel %vm1164, %v1163, %v1163
    %vm1166 = vcmask 1043459
    %v1167 = vsel %vm1166, %v1163, %v1165
    %vm1168 = vcmask 1044484
    %v1169 = vsel %vm1168, %v1163, %v1167
    %vm1170 = vcmask 1045509
    %v1171 = vsel %vm1170, %v1163, %v1169
    %vm1172 = vcmask 1046534
    %v1173 = vsel %vm1172, %v1163, %v1171
    %vm1174 = vcmask 1047559
    %v1175 = vsel %vm1174, %v1163, %v1173
    %v1177 = vadd.f32 %v1092, %v1175
    %1178 = vset.pattern.permute.xlu0 0
    %1179 = vperm.xlu0 %1178, %v200
    %v1180 = vpop.permute.xlu0 %1179
    %vm1181 = vcmp.eq.s32.totalorder %v1103, %v1180
    %v1182 = vsel %vm1181, %v1177, 0.0
    %vm1183 = vcmask 588800
    %v1184 = vsel %vm1183, %v1182, 0.0
    %1185 = vadd.xlane.f32.xlu0 %v1184
    %v1186 = vpop.xlane.xlu0 %1185
    %v1187 = vmax.f32 %v1186, 1e-12
    %v1188 = vmin.f32 %v1187, 1e+12
    %vm1189 = vcmask 7168
    %1190 = vst.msk [vmem:[%s3] sm:$0xff] %vm1189, %v1188
    // Predicated region
    $region22: #{tpu_custom_call.1} parent=1 // pred_check
      _
    $region23: #{tpu_custom_call.1} parent=1 // pred_check_branch
      %1192 = sbr.rel (0) target = $region25
    $region24: #{tpu_custom_call.1} parent=1 // pred_region
      _
    $region25: #{tpu_custom_call.1} parent=1 // pred_fallthru
      _
    // Predicated region
    $region26: #{tpu_custom_call.1} parent=1 // pred_check
      _
    $region27: #{tpu_custom_call.1} parent=1 // pred_check_branch
      %1194 = sbr.rel (0) target = $region29
    $region28: #{tpu_custom_call.1} parent=1 // pred_region
      _
    $region29: #{tpu_custom_call.1} parent=1 // pred_fallthru
      _
    %1195 = vsyncpa [#allocation3], 1
    %1196 = vsyncpa [#allocation5], 1

</llo_original>
